<compile_context>
chip_gen: v6e
topology: v6e:2x2x1
jax: 0.10.0
libtpu: 0.0.40
codegen_flags: <defaults>
</compile_context>

<pallas_src>
import functools

import jax
import jax.numpy as jnp
from jax.experimental import pallas as pl
from jax.experimental.pallas import tpu as pltpu


_MIN_BLOCK_ROWS = 16               # smallest tile rows (bf16-friendly sublane tiling)
_LANE_CHOICES = (1024, 512, 256, 128)


def _round_down(x, m):
    return (x // m) * m


def _cdiv(a, b):
    return -(-a // b)


def _tpu_params():
    """Returns (num_tensorcores, max_block_rows, vmem_limit_bytes_or_None)."""
    kind = ""
    try:
        dev = jax.devices()[0]
        if dev.platform == "tpu":
            kind = dev.device_kind.lower()
    except Exception:
        pass
    if "v7" in kind:
        # 2 TCs/chip, 3.2 TB/s HBM: big blocks matter; 64 MiB physical VMEM.
        return 2, 2048, 48 * 1024 * 1024
    if "v6" in kind:
        # 1 TC; 16 MiB of f32 input double-buffers fits the 32 MiB scoped default.
        return 1, 1024, None
    if "v4" in kind:
        # Megacore: 2 TCs, keep conservative 512-row blocks.
        return 2, 512, None
    if "v5" in kind:
        # 16 MiB scoped-VMEM default: keep 512-row blocks.
        return 1, 512, None
    return 1, 512, None


def _bce_elementwise(x, y, with_logits):
    """Per-element BCE loss in f32 (inputs upcast here, not in the wrapper)."""
    x = x.astype(jnp.float32)
    y = y.astype(jnp.float32)
    if with_logits:
        # Numerically stable BCEWithLogits:
        #   l = max(x, 0) - x*y + softplus(-|x|)
        # Written as a single exp + single log (EUP: 2 pushes/vreg).
        return jnp.maximum(x, 0.0) - x * y + jnp.log(1.0 + jnp.exp(-jnp.abs(x)))
    # BCELoss on probabilities; PyTorch clamps the log terms at -100.
    log_p = jnp.maximum(jnp.log(x), -100.0)
    log_1mp = jnp.maximum(jnp.log1p(-x), -100.0)
    return -(y * log_p + (1.0 - y) * log_1mp)


def _bce_kernel(x_ref, y_ref, o_ref, acc_ref, *, block_rows, with_logits):
    t = pl.program_id(1)

    @pl.when(t == 0)
    def _init():
        acc_ref[...] = jnp.zeros_like(acc_ref)

    loss = _bce_elementwise(x_ref[...], y_ref[...], with_logits)

    # Fold the (block_rows, lanes) loss block into an (8, lanes) partial while
    # it is still in registers (tile-aligned 8-row slices, pure VPU adds).
    partial = loss[0:8, :]
    for r in range(1, block_rows // 8):
        partial = partial + loss[r * 8:(r + 1) * 8, :]
    acc_ref[...] += partial

    @pl.when(t == pl.num_programs(1) - 1)
    def _finalize():
        o_ref[...] = acc_ref[...]


def bce_loss(output, target, *, with_logits=True):
    """JAX/Pallas equivalent of BCELossWrapper.forward (mean reduction).

    output, target: (N, *) arrays; returns a scalar float32 loss.
    """
    total = output.size
    x_flat = output.reshape(-1)
    y_flat = target.reshape(-1)

    if total == 0:
        # Matches PyTorch: mean over zero elements is nan.
        return jnp.float32(jnp.nan)

    num_cores_hw, max_block_rows, vmem_limit = _tpu_params()

    lanes = next((l for l in _LANE_CHOICES if total % l == 0), None)

    if lanes is None or total // lanes < _MIN_BLOCK_ROWS:
        # TODO(synk): element counts that are not a multiple of 128 (or tiny
        # inputs) cannot be reshaped to a lane-dense 2-D view without
        # materializing a copy, so they use a plain-XLA reduction instead.
        return jnp.sum(_bce_elementwise(x_flat, y_flat, with_logits)) / jnp.float32(total)

    rows = total // lanes
    x2d = x_flat.reshape(rows, lanes)   # free: contiguous row-major view
    y2d = y_flat.reshape(rows, lanes)

    # Tile layout: grid = (num_cores, tiles_per_core) over the largest exactly
    # tiled prefix; the leftover rows (< one block per core) go to a JAX tail.
    num_cores = num_cores_hw if rows >= num_cores_hw * _MIN_BLOCK_ROWS else 1
    tiles_per_core = _cdiv(rows, num_cores * max_block_rows)
    block_rows = _round_down(rows // (num_cores * tiles_per_core), _MIN_BLOCK_ROWS)
    tiles_per_core = rows // (num_cores * block_rows)       # shrink the tail
    main_rows = num_cores * tiles_per_core * block_rows     # <= rows, no padding

    kernel = functools.partial(
        _bce_kernel, block_rows=block_rows, with_logits=with_logits)

    compiler_kwargs = dict(dimension_semantics=("parallel", "arbitrary"))
    if vmem_limit is not None:
        compiler_kwargs["vmem_limit_bytes"] = vmem_limit

    partials = pl.pallas_call(
        kernel,
        out_shape=jax.ShapeDtypeStruct((num_cores * 8, lanes), jnp.float32),
        grid_spec=pltpu.PrefetchScalarGridSpec(
            num_scalar_prefetch=0,
            grid=(num_cores, tiles_per_core),
            in_specs=[
                pl.BlockSpec((block_rows, lanes),
                             lambda p, t: (p * tiles_per_core + t, 0)),
                pl.BlockSpec((block_rows, lanes),
                             lambda p, t: (p * tiles_per_core + t, 0)),
            ],
            out_specs=pl.BlockSpec((8, lanes), lambda p, t: (p, 0)),
            scratch_shapes=[pltpu.VMEM((8, lanes), jnp.float32)],
        ),
        compiler_params=pltpu.CompilerParams(**compiler_kwargs),
    )(x2d, y2d)

    loss_sum = partials.sum()

    if main_rows < rows:
        # Ragged row tail (< one block per core): tiny plain-JAX reduction.
        loss_sum = loss_sum + jnp.sum(
            _bce_elementwise(x2d[main_rows:], y2d[main_rows:], with_logits))

    return loss_sum / jnp.float32(total)


if __name__ == "__main__":
    key = jax.random.PRNGKey(0)
    ks = jax.random.split(key, 8)

    loss_fn = jax.jit(bce_loss, static_argnames=("with_logits",))

    def ref_with_logits(x, y):
        x = x.astype(jnp.float32)
        y = y.astype(jnp.float32)
        return jnp.mean(jnp.maximum(x, 0.0) - x * y + jnp.log1p(jnp.exp(-jnp.abs(x))))

    def ref_probs(p, y):
        p = p.astype(jnp.float32)
        y = y.astype(jnp.float32)
        lp = jnp.maximum(jnp.log(p), -100.0)
        l1p = jnp.maximum(jnp.log1p(-p), -100.0)
        return jnp.mean(-(y * lp + (1.0 - y) * l1p))

    # 1) Main case: lane-divisible shape -> Pallas kernel path, no tail.
    x1 = jax.random.normal(ks[0], (2, 4, 64, 64), dtype=jnp.float32)
    y1 = jax.random.bernoulli(ks[1], 0.5, (2, 4, 64, 64)).astype(jnp.float32)
    got = jax.block_until_ready(loss_fn(x1, y1))
    want = ref_with_logits(x1, y1)
    assert jnp.allclose(got, want, rtol=1e-5, atol=1e-5), ("case1", got, want)

    # 2) Ragged row count + bf16 inputs -> kernel prefix + tiny JAX tail.
    x2 = jax.random.normal(ks[2], (3, 4, 40, 64), dtype=jnp.bfloat16)
    y2 = jax.random.bernoulli(ks[3], 0.5, (3, 4, 40, 64)).astype(jnp.bfloat16)
    got = jax.block_until_ready(loss_fn(x2, y2))
    want = ref_with_logits(x2, y2)
    assert jnp.allclose(got, want, rtol=1e-5, atol=1e-5), ("case2", got, want)

    # 3) Probability mode (with_logits=False).
    p3 = jax.nn.sigmoid(jax.random.normal(ks[4], (2, 4, 64, 64), dtype=jnp.float32))
    y3 = jax.random.bernoulli(ks[5], 0.5, (2, 4, 64, 64)).astype(jnp.float32)
    got = jax.block_until_ready(loss_fn(p3, y3, with_logits=False))
    want = ref_probs(p3, y3)
    assert jnp.allclose(got, want, rtol=1e-5, atol=1e-5), ("case3", got, want)

    # 4) Tiny shape (2,4,16,16) -> plain-JAX fallback path.
    x4 = jax.random.normal(ks[6], (2, 4, 16, 16), dtype=jnp.float32)
    y4 = jax.random.bernoulli(ks[7], 0.5, (2, 4, 16, 16)).astype(jnp.float32)
    got = jax.block_until_ready(loss_fn(x4, y4))
    want = ref_with_logits(x4, y4)
    assert jnp.allclose(got, want, rtol=1e-5, atol=1e-5), ("case4", got, want)

    print("KERNEL_OK")
</pallas_src>

<mosaic_0001>
module attributes {stable_mosaic.version = 11 : i64} {
  func.func @_bce_kernel(%arg0: i32, %arg1: i32, %arg2: memref<32x1024xf32, #tpu.memory_space<vmem>>, %arg3: memref<32x1024xf32, #tpu.memory_space<vmem>>, %arg4: memref<8x1024xf32, #tpu.memory_space<vmem>>, %arg5: memref<8x1024xf32, #tpu.memory_space<vmem>>) attributes {dimension_semantics = [#tpu.dimension_semantics<parallel>, #tpu.dimension_semantics<arbitrary>], iteration_bounds = array<i64: 1, 1>, scalar_prefetch = 0 : i64, scratch_operands = 1 : i64, tpu.core_type = #tpu.core_type<tc>, window_params = [{transform_indices = @transform_0, window_bounds = array<i64: 32, 1024>}, {transform_indices = @transform_1, window_bounds = array<i64: 32, 1024>}, {transform_indices = @transform_2, window_bounds = array<i64: 8, 1024>}]} {
    %c0_i32 = arith.constant 0 : i32
    %0 = arith.cmpi eq, %arg1, %c0_i32 : i32
    %1 = arith.extui %0 : i1 to i32
    %c0_i32_0 = arith.constant 0 : i32
    %2 = arith.cmpi ne, %1, %c0_i32_0 : i32
    scf.if %2 {
      %cst_12 = arith.constant 0.000000e+00 : f32
      %30 = vector.broadcast %cst_12 : f32 to vector<8x1024xf32>
      %c0_13 = arith.constant 0 : index
      %c0_14 = arith.constant 0 : index
      %31 = vector.load %arg5[%c0_13, %c0_14] : memref<8x1024xf32, #tpu.memory_space<vmem>>, vector<8x1024xf32>
      tpu.vector_store %arg5[%c0_13, %c0_14], %30 {strides = array<i32>} : memref<8x1024xf32, #tpu.memory_space<vmem>>, vector<8x1024xf32>,
    } else {
    }
    %c0 = arith.constant 0 : index
    %c0_1 = arith.constant 0 : index
    %3 = vector.load %arg2[%c0, %c0_1] : memref<32x1024xf32, #tpu.memory_space<vmem>>, vector<32x1024xf32>
    %c0_2 = arith.constant 0 : index
    %c0_3 = arith.constant 0 : index
    %4 = vector.load %arg3[%c0_2, %c0_3] : memref<32x1024xf32, #tpu.memory_space<vmem>>, vector<32x1024xf32>
    %cst = arith.constant 0.000000e+00 : f32
    %5 = vector.broadcast %cst : f32 to vector<32x1024xf32>
    %6 = arith.maximumf %3, %5 : vector<32x1024xf32>
    %7 = arith.mulf %3, %4 : vector<32x1024xf32>
    %8 = arith.subf %6, %7 : vector<32x1024xf32>
    %9 = math.absf %3 : vector<32x1024xf32>
    %cst_4 = arith.constant 0.000000e+00 : f32
    %10 = vector.broadcast %cst_4 : f32 to vector<32x1024xf32>
    %11 = arith.subf %10, %9 : vector<32x1024xf32>
    %12 = math.exp %11 : vector<32x1024xf32>
    %cst_5 = arith.constant 1.000000e+00 : f32
    %13 = vector.broadcast %cst_5 : f32 to vector<32x1024xf32>
    %14 = arith.addf %13, %12 : vector<32x1024xf32>
    %15 = math.log %14 : vector<32x1024xf32>
    %16 = arith.addf %8, %15 : vector<32x1024xf32>
    %17 = vector.extract_strided_slice %16 {offsets = [0, 0], sizes = [8, 1024], strides = [1, 1]} : vector<32x1024xf32> to vector<8x1024xf32>
    %18 = vector.extract_strided_slice %16 {offsets = [8, 0], sizes = [8, 1024], strides = [1, 1]} : vector<32x1024xf32> to vector<8x1024xf32>
    %19 = arith.addf %17, %18 : vector<8x1024xf32>
    %20 = vector.extract_strided_slice %16 {offsets = [16, 0], sizes = [8, 1024], strides = [1, 1]} : vector<32x1024xf32> to vector<8x1024xf32>
    %21 = arith.addf %19, %20 : vector<8x1024xf32>
    %22 = vector.extract_strided_slice %16 {offsets = [24, 0], sizes = [8, 1024], strides = [1, 1]} : vector<32x1024xf32> to vector<8x1024xf32>
    %23 = arith.addf %21, %22 : vector<8x1024xf32>
    %c0_6 = arith.constant 0 : index
    %c0_7 = arith.constant 0 : index
    %24 = vector.load %arg5[%c0_6, %c0_7] : memref<8x1024xf32, #tpu.memory_space<vmem>>, vector<8x1024xf32>
    %25 = arith.addf %24, %23 : vector<8x1024xf32>
    %c0_8 = arith.constant 0 : index
    %c0_9 = arith.constant 0 : index
    %26 = vector.load %arg5[%c0_8, %c0_9] : memref<8x1024xf32, #tpu.memory_space<vmem>>, vector<8x1024xf32>
    tpu.vector_store %arg5[%c0_8, %c0_9], %25 {strides = array<i32>} : memref<8x1024xf32, #tpu.memory_space<vmem>>, vector<8x1024xf32>,
    %c0_i32_10 = arith.constant 0 : i32
    %27 = arith.cmpi eq, %arg1, %c0_i32_10 : i32
    %28 = arith.extui %27 : i1 to i32
    %c0_i32_11 = arith.constant 0 : i32
    %29 = arith.cmpi ne, %28, %c0_i32_11 : i32
    scf.if %29 {
      %c0_12 = arith.constant 0 : index
      %c0_13 = arith.constant 0 : index
      %30 = vector.load %arg5[%c0_12, %c0_13] : memref<8x1024xf32, #tpu.memory_space<vmem>>, vector<8x1024xf32>
      %c0_14 = arith.constant 0 : index
      %c0_15 = arith.constant 0 : index
      %31 = vector.load %arg4[%c0_14, %c0_15] : memref<8x1024xf32, #tpu.memory_space<vmem>>, vector<8x1024xf32>
      tpu.vector_store %arg4[%c0_14, %c0_15], %30 {strides = array<i32>} : memref<8x1024xf32, #tpu.memory_space<vmem>>, vector<8x1024xf32>,
    } else {
    }
    return
  }
  func.func @transform_0(%arg0: i32, %arg1: i32) -> (i32, i32) {
    %c1_i32 = arith.constant 1 : i32
    %0 = arith.muli %arg0, %c1_i32 : i32
    %1 = arith.addi %0, %arg1 : i32
    %c0_i32 = arith.constant 0 : i32
    %c0_i32_0 = arith.constant 0 : i32
    return %1, %c0_i32 : i32, i32
  }
  func.func @transform_1(%arg0: i32, %arg1: i32) -> (i32, i32) {
    %c1_i32 = arith.constant 1 : i32
    %0 = arith.muli %arg0, %c1_i32 : i32
    %1 = arith.addi %0, %arg1 : i32
    %c0_i32 = arith.constant 0 : i32
    %c0_i32_0 = arith.constant 0 : i32
    return %1, %c0_i32 : i32, i32
  }
  func.func @transform_2(%arg0: i32, %arg1: i32) -> (i32, i32) {
    %c0_i32 = arith.constant 0 : i32
    %c0_i32_0 = arith.constant 0 : i32
    return %arg0, %c0_i32 : i32, i32
  }
}

</mosaic_0001>

<llo_original>
// kernel: bce_loss.1
$region0: #{bce_loss.1}
  #allocation0 [shape = 'u32[]', space=smem, size = 0x4, offset = 0x4, fixed_abs, tag = 'smem constant byte address 0x4 - core index']
  #allocation1 [shape = 'u32[144,128]{1,0:T(1,128)}', space=vmem, size = 0x12000, scoped, tag = 'internal scratch']
  #allocation2 [shape = 'f32[8,1024]{1,0:T(8,128)}', space=vmem, size = 0x8000, scoped, tag = 'scratch operand']
  %s0 = inlined_call_operand.vmem [shape: f32[32,1024], index: 0, kind: input, shape index: {}]
  %s1 = inlined_call_operand.vmem [shape: f32[32,1024], index: 1, kind: input, shape index: {}]
  %s2 = inlined_call_operand.vmem [shape: f32[8,1024], index: 2, kind: output, shape index: {}]
  %s3 = sld [smem:[#allocation0]]
  $region26: #{bce_loss.1} parent=0
    _
  %s5 = ssub.s32 1, %s3
  %s6 = scalar_select 0, %s5, %s3
  // Predicated region
  $region2: #{bce_loss.1} parent=0 // pred_check
    _
  $region3: #{bce_loss.1} parent=0 // pred_check_branch
    %8 = sbr.rel (0) target = $region5
  $region4: #{bce_loss.1} parent=0 // pred_region
    %s9 = sadd.s32 0, 0
    %s10 = smul.u32 4, %s9
    %p11 = scmp.lt.s32.totalorder %s10, 3
    %s12 = scalar_select %p11, %s10, 3
    %s13 = smul.addr %s12, 8
    %s14 = smul.addr %s13, 8
    %s15 = scalar_lea.vmem %s0, %s14
    %s16 = sadd.s32 0, 0
    %s17 = smul.u32 4, %s16
  $region5: #{bce_loss.1} parent=0 // pred_fallthru
    _
  // Predicated region
  $region6: #{bce_loss.1} parent=0 // pred_check
    _
  $region7: #{bce_loss.1} parent=0 // pred_check_branch
    %19 = sbr.rel (0) target = $region9
  $region8: #{bce_loss.1} parent=0 // pred_region
    %s20 = sadd.s32 0, 0
    %s21 = smul.u32 4, %s20
    %p22 = scmp.lt.s32.totalorder %s21, 3
    %s23 = scalar_select %p22, %s21, 3
    %s24 = smul.addr %s23, 8
    %s25 = smul.addr %s24, 8
    %s26 = scalar_lea.vmem %s1, %s25
    %s27 = sadd.s32 0, 0
    %s28 = smul.u32 4, %s27
  $region9: #{bce_loss.1} parent=0 // pred_fallthru
    _
  %s29 = sadd.s32 0, 0
  %s30 = smul.u32 4, %s29
  %p31 = scmp.lt.s32.totalorder %s30, 3
  %s32 = scalar_select %p31, %s30, 3
  %s33 = smul.addr %s32, 8
  %s34 = smul.addr %s33, 8
  %s35 = scalar_lea.vmem %s0, %s34
  %s36 = sadd.s32 0, 0
  %s37 = smul.u32 4, %s36
  %p38 = scmp.lt.s32.totalorder %s37, 3
  %s39 = scalar_select %p38, %s37, 3
  %s40 = smul.addr %s39, 8
  %s41 = smul.addr %s40, 8
  %s42 = scalar_lea.vmem %s1, %s41
  %s43 = sadd.s32 0, 0
  %s44 = smul.u32 4, %s43
  %p45 = scmp.lt.s32.totalorder %s44, 3
  %s46 = scalar_select %p45, %s44, 3
  %s47 = smul.addr %s46, 8
  %s48 = smul.addr %s47, 8
  %s49 = scalar_lea.vmem %s0, %s48
  %s50 = sadd.s32 0, 0
  %s51 = smul.u32 4, %s50
  %s52 = sadd.s32 0, 0
  %s53 = smul.u32 4, %s52
  %p54 = scmp.lt.s32.totalorder %s53, 3
  %s55 = scalar_select %p54, %s53, 3
  %s56 = smul.addr %s55, 8
  %s57 = smul.addr %s56, 8
  %s58 = scalar_lea.vmem %s1, %s57
  %s59 = sadd.s32 0, 0
  %s60 = smul.u32 4, %s59
  %p61 = scmp.eq.s32.totalorder 0, 0
  // Predicated region
  $region10: #{bce_loss.1} parent=0 // pred_check
    %p62 = pneg %p61
  $region11: #{bce_loss.1} parent=0 // pred_check_branch
    %64 = sbr.rel (%p62) target = $region13
  $region12: #{bce_loss.1} parent=0 // pred_region
    %65 = vst [vmem:[#allocation2] sm:$0xff] 0.0
    %66 = vst [vmem:[#allocation2 + $0x8] sm:$0xff] 0.0
    %67 = vst [vmem:[#allocation2 + $0x10] sm:$0xff] 0.0
    %68 = vst [vmem:[#allocation2 + $0x18] sm:$0xff] 0.0
    %69 = vst [vmem:[#allocation2 + $0x20] sm:$0xff] 0.0
    %70 = vst [vmem:[#allocation2 + $0x28] sm:$0xff] 0.0
    %71 = vst [vmem:[#allocation2 + $0x30] sm:$0xff] 0.0
    %72 = vst [vmem:[#allocation2 + $0x38] sm:$0xff] 0.0
  $region13: #{bce_loss.1} parent=0 // pred_fallthru
    _
  %v73 = vld [vmem:[%s49] sm:$0xff]
  %v74 = vld [vmem:[%s49 + $0x8] sm:$0xff]
  %v75 = vld [vmem:[%s49 + $0x10] sm:$0xff]
  %v76 = vld [vmem:[%s49 + $0x18] sm:$0xff]
  %v77 = vld [vmem:[%s49 + $0x20] sm:$0xff]
  %v78 = vld [vmem:[%s49 + $0x28] sm:$0xff]
  %v79 = vld [vmem:[%s49 + $0x30] sm:$0xff]
  %v80 = vld [vmem:[%s49 + $0x38] sm:$0xff]
  %v81 = vld [vmem:[%s49 + $0x40] sm:$0xff]
  %v82 = vld [vmem:[%s49 + $0x48] sm:$0xff]
  %v83 = vld [vmem:[%s49 + $0x50] sm:$0xff]
  %v84 = vld [vmem:[%s49 + $0x58] sm:$0xff]
  %v85 = vld [vmem:[%s49 + $0x60] sm:$0xff]
  %v86 = vld [vmem:[%s49 + $0x68] sm:$0xff]
  %v87 = vld [vmem:[%s49 + $0x70] sm:$0xff]
  %v88 = vld [vmem:[%s49 + $0x78] sm:$0xff]
  %v89 = vld [vmem:[%s49 + $0x80] sm:$0xff]
  %v90 = vld [vmem:[%s49 + $0x88] sm:$0xff]
  %v91 = vld [vmem:[%s49 + $0x90] sm:$0xff]
  %v92 = vld [vmem:[%s49 + $0x98] sm:$0xff]
  %v93 = vld [vmem:[%s49 + $0xa0] sm:$0xff]
  %v94 = vld [vmem:[%s49 + $0xa8] sm:$0xff]
  %v95 = vld [vmem:[%s49 + $0xb0] sm:$0xff]
  %v96 = vld [vmem:[%s49 + $0xb8] sm:$0xff]
  %v97 = vld [vmem:[%s49 + $0xc0] sm:$0xff]
  %v98 = vld [vmem:[%s49 + $0xc8] sm:$0xff]
  %v99 = vld [vmem:[%s49 + $0xd0] sm:$0xff]
  %v100 = vld [vmem:[%s49 + $0xd8] sm:$0xff]
  %v101 = vld [vmem:[%s49 + $0xe0] sm:$0xff]
  %v102 = vld [vmem:[%s49 + $0xe8] sm:$0xff]
  %v103 = vld [vmem:[%s49 + $0xf0] sm:$0xff]
  %v104 = vld [vmem:[%s49 + $0xf8] sm:$0xff]
  %v105 = vld [vmem:[%s58] sm:$0xff]
  %v106 = vld [vmem:[%s58 + $0x8] sm:$0xff]
  %v107 = vld [vmem:[%s58 + $0x10] sm:$0xff]
  %v108 = vld [vmem:[%s58 + $0x18] sm:$0xff]
  %v109 = vld [vmem:[%s58 + $0x20] sm:$0xff]
  %v110 = vld [vmem:[%s58 + $0x28] sm:$0xff]
  %v111 = vld [vmem:[%s58 + $0x30] sm:$0xff]
  %v112 = vld [vmem:[%s58 + $0x38] sm:$0xff]
  %v113 = vld [vmem:[%s58 + $0x40] sm:$0xff]
  %v114 = vld [vmem:[%s58 + $0x48] sm:$0xff]
  %v115 = vld [vmem:[%s58 + $0x50] sm:$0xff]
  %v116 = vld [vmem:[%s58 + $0x58] sm:$0xff]
  %v117 = vld [vmem:[%s58 + $0x60] sm:$0xff]
  %v118 = vld [vmem:[%s58 + $0x68] sm:$0xff]
  %v119 = vld [vmem:[%s58 + $0x70] sm:$0xff]
  %v120 = vld [vmem:[%s58 + $0x78] sm:$0xff]
  %v121 = vld [vmem:[%s58 + $0x80] sm:$0xff]
  %v122 = vld [vmem:[%s58 + $0x88] sm:$0xff]
  %v123 = vld [vmem:[%s58 + $0x90] sm:$0xff]
  %v124 = vld [vmem:[%s58 + $0x98] sm:$0xff]
  %v125 = vld [vmem:[%s58 + $0xa0] sm:$0xff]
  %v126 = vld [vmem:[%s58 + $0xa8] sm:$0xff]
  %v127 = vld [vmem:[%s58 + $0xb0] sm:$0xff]
  %v128 = vld [vmem:[%s58 + $0xb8] sm:$0xff]
  %v129 = vld [vmem:[%s58 + $0xc0] sm:$0xff]
  %v130 = vld [vmem:[%s58 + $0xc8] sm:$0xff]
  %v131 = vld [vmem:[%s58 + $0xd0] sm:$0xff]
  %v132 = vld [vmem:[%s58 + $0xd8] sm:$0xff]
  %v133 = vld [vmem:[%s58 + $0xe0] sm:$0xff]
  %v134 = vld [vmem:[%s58 + $0xe8] sm:$0xff]
  %v135 = vld [vmem:[%s58 + $0xf0] sm:$0xff]
  %v136 = vld [vmem:[%s58 + $0xf8] sm:$0xff]
  %v137 = vmax.f32 %v73, 0.0
  %v138 = vmax.f32 %v74, 0.0
  %v139 = vmax.f32 %v75, 0.0
  %v140 = vmax.f32 %v76, 0.0
  %v141 = vmax.f32 %v77, 0.0
  %v142 = vmax.f32 %v78, 0.0
  %v143 = vmax.f32 %v79, 0.0
  %v144 = vmax.f32 %v80, 0.0
  %v145 = vmax.f32 %v81, 0.0
  %v146 = vmax.f32 %v82, 0.0
  %v147 = vmax.f32 %v83, 0.0
  %v148 = vmax.f32 %v84, 0.0
  %v149 = vmax.f32 %v85, 0.0
  %v150 = vmax.f32 %v86, 0.0
  %v151 = vmax.f32 %v87, 0.0
  %v152 = vmax.f32 %v88, 0.0
  %v153 = vmax.f32 %v89, 0.0
  %v154 = vmax.f32 %v90, 0.0
  %v155 = vmax.f32 %v91, 0.0
  %v156 = vmax.f32 %v92, 0.0
  %v157 = vmax.f32 %v93, 0.0
  %v158 = vmax.f32 %v94, 0.0
  %v159 = vmax.f32 %v95, 0.0
  %v160 = vmax.f32 %v96, 0.0
  %v161 = vmax.f32 %v97, 0.0
  %v162 = vmax.f32 %v98, 0.0
  %v163 = vmax.f32 %v99, 0.0
  %v164 = vmax.f32 %v100, 0.0
  %v165 = vmax.f32 %v101, 0.0
  %v166 = vmax.f32 %v102, 0.0
  %v167 = vmax.f32 %v103, 0.0
  %v168 = vmax.f32 %v104, 0.0
  %v169 = vmul.f32 %v73, %v105
  %v170 = vmul.f32 %v74, %v106
  %v171 = vmul.f32 %v75, %v107
  %v172 = vmul.f32 %v76, %v108
  %v173 = vmul.f32 %v77, %v109
  %v174 = vmul.f32 %v78, %v110
  %v175 = vmul.f32 %v79, %v111
  %v176 = vmul.f32 %v80, %v112
  %v177 = vmul.f32 %v81, %v113
  %v178 = vmul.f32 %v82, %v114
  %v179 = vmul.f32 %v83, %v115
  %v180 = vmul.f32 %v84, %v116
  %v181 = vmul.f32 %v85, %v117
  %v182 = vmul.f32 %v86, %v118
  %v183 = vmul.f32 %v87, %v119
  %v184 = vmul.f32 %v88, %v120
  %v185 = vmul.f32 %v89, %v121
  %v186 = vmul.f32 %v90, %v122
  %v187 = vmul.f32 %v91, %v123
  %v188 = vmul.f32 %v92, %v124
  %v189 = vmul.f32 %v93, %v125
  %v190 = vmul.f32 %v94, %v126
  %v191 = vmul.f32 %v95, %v127
  %v192 = vmul.f32 %v96, %v128
  %v193 = vmul.f32 %v97, %v129
  %v194 = vmul.f32 %v98, %v130
  %v195 = vmul.f32 %v99, %v131
  %v196 = vmul.f32 %v100, %v132
  %v197 = vmul.f32 %v101, %v133
  %v198 = vmul.f32 %v102, %v134
  %v199 = vmul.f32 %v103, %v135
  %v200 = vmul.f32 %v104, %v136
  %v201 = vsub.f32 %v137, %v169
  %v202 = vsub.f32 %v138, %v170
  %v203 = vsub.f32 %v139, %v171
  %v204 = vsub.f32 %v140, %v172
  %v205 = vsub.f32 %v141, %v173
  %v206 = vsub.f32 %v142, %v174
  %v207 = vsub.f32 %v143, %v175
  %v208 = vsub.f32 %v144, %v176
  %v209 = vsub.f32 %v145, %v177
  %v210 = vsub.f32 %v146, %v178
  %v211 = vsub.f32 %v147, %v179
  %v212 = vsub.f32 %v148, %v180
  %v213 = vsub.f32 %v149, %v181
  %v214 = vsub.f32 %v150, %v182
  %v215 = vsub.f32 %v151, %v183
  %v216 = vsub.f32 %v152, %v184
  %v217 = vsub.f32 %v153, %v185
  %v218 = vsub.f32 %v154, %v186
  %v219 = vsub.f32 %v155, %v187
  %v220 = vsub.f32 %v156, %v188
  %v221 = vsub.f32 %v157, %v189
  %v222 = vsub.f32 %v158, %v190
  %v223 = vsub.f32 %v159, %v191
  %v224 = vsub.f32 %v160, %v192
  %v225 = vsub.f32 %v161, %v193
  %v226 = vsub.f32 %v162, %v194
  %v227 = vsub.f32 %v163, %v195
  %v228 = vsub.f32 %v164, %v196
  %v229 = vsub.f32 %v165, %v197
  %v230 = vsub.f32 %v166, %v198
  %v231 = vsub.f32 %v167, %v199
  %v232 = vsub.f32 %v168, %v200
  %v233 = vand.u32 2147483647, %v73
  %v234 = vand.u32 2147483647, %v74
  %v235 = vand.u32 2147483647, %v75
  %v236 = vand.u32 2147483647, %v76
  %v237 = vand.u32 2147483647, %v77
  %v238 = vand.u32 2147483647, %v78
  %v239 = vand.u32 2147483647, %v79
  %v240 = vand.u32 2147483647, %v80
  %v241 = vand.u32 2147483647, %v81
  %v242 = vand.u32 2147483647, %v82
  %v243 = vand.u32 2147483647, %v83
  %v244 = vand.u32 2147483647, %v84
  %v245 = vand.u32 2147483647, %v85
  %v246 = vand.u32 2147483647, %v86
  %v247 = vand.u32 2147483647, %v87
  %v248 = vand.u32 2147483647, %v88
  %v249 = vand.u32 2147483647, %v89
  %v250 = vand.u32 2147483647, %v90
  %v251 = vand.u32 2147483647, %v91
  %v252 = vand.u32 2147483647, %v92
  %v253 = vand.u32 2147483647, %v93
  %v254 = vand.u32 2147483647, %v94
  %v255 = vand.u32 2147483647, %v95
  %v256 = vand.u32 2147483647, %v96
  %v257 = vand.u32 2147483647, %v97
  %v258 = vand.u32 2147483647, %v98
  %v259 = vand.u32 2147483647, %v99
  %v260 = vand.u32 2147483647, %v100
  %v261 = vand.u32 2147483647, %v101
  %v262 = vand.u32 2147483647, %v102
  %v263 = vand.u32 2147483647, %v103
  %v264 = vand.u32 2147483647, %v104
  %v265 = vsub.f32 0.0, %v233
  %v266 = vsub.f32 0.0, %v234
  %v267 = vsub.f32 0.0, %v235
  %v268 = vsub.f32 0.0, %v236
  %v269 = vsub.f32 0.0, %v237
  %v270 = vsub.f32 0.0, %v238
  %v271 = vsub.f32 0.0, %v239
  %v272 = vsub.f32 0.0, %v240
  %v273 = vsub.f32 0.0, %v241
  %v274 = vsub.f32 0.0, %v242
  %v275 = vsub.f32 0.0, %v243
  %v276 = vsub.f32 0.0, %v244
  %v277 = vsub.f32 0.0, %v245
  %v278 = vsub.f32 0.0, %v246
  %v279 = vsub.f32 0.0, %v247
  %v280 = vsub.f32 0.0, %v248
  %v281 = vsub.f32 0.0, %v249
  %v282 = vsub.f32 0.0, %v250
  %v283 = vsub.f32 0.0, %v251
  %v284 = vsub.f32 0.0, %v252
  %v285 = vsub.f32 0.0, %v253
  %v286 = vsub.f32 0.0, %v254
  %v287 = vsub.f32 0.0, %v255
  %v288 = vsub.f32 0.0, %v256
  %v289 = vsub.f32 0.0, %v257
  %v290 = vsub.f32 0.0, %v258
  %v291 = vsub.f32 0.0, %v259
  %v292 = vsub.f32 0.0, %v260
  %v293 = vsub.f32 0.0, %v261
  %v294 = vsub.f32 0.0, %v262
  %v295 = vsub.f32 0.0, %v263
  %v296 = vsub.f32 0.0, %v264
  %v297 = vmul.f32 %v265, 1.442695
  %v298 = vpow.pop %v297
  %v299 = vmul.f32 %v266, 1.442695
  %v300 = vpow.pop %v299
  %v301 = vmul.f32 %v267, 1.442695
  %v302 = vpow.pop %v301
  %v303 = vmul.f32 %v268, 1.442695
  %v304 = vpow.pop %v303
  %v305 = vmul.f32 %v269, 1.442695
  %v306 = vpow.pop %v305
  %v307 = vmul.f32 %v270, 1.442695
  %v308 = vpow.pop %v307
  %v309 = vmul.f32 %v271, 1.442695
  %v310 = vpow.pop %v309
  %v311 = vmul.f32 %v272, 1.442695
  %v312 = vpow.pop %v311
  %v313 = vmul.f32 %v273, 1.442695
  %v314 = vpow.pop %v313
  %v315 = vmul.f32 %v274, 1.442695
  %v316 = vpow.pop %v315
  %v317 = vmul.f32 %v275, 1.442695
  %v318 = vpow.pop %v317
  %v319 = vmul.f32 %v276, 1.442695
  %v320 = vpow.pop %v319
  %v321 = vmul.f32 %v277, 1.442695
  %v322 = vpow.pop %v321
  %v323 = vmul.f32 %v278, 1.442695
  %v324 = vpow.pop %v323
  %v325 = vmul.f32 %v279, 1.442695
  %v326 = vpow.pop %v325
  %v327 = vmul.f32 %v280, 1.442695
  %v328 = vpow.pop %v327
  %v329 = vmul.f32 %v281, 1.442695
  %v330 = vpow.pop %v329
  %v331 = vmul.f32 %v282, 1.442695
  %v332 = vpow.pop %v331
  %v333 = vmul.f32 %v283, 1.442695
  %v334 = vpow.pop %v333
  %v335 = vmul.f32 %v284, 1.442695
  %v336 = vpow.pop %v335
  %v337 = vmul.f32 %v285, 1.442695
  %v338 = vpow.pop %v337
  %v339 = vmul.f32 %v286, 1.442695
  %v340 = vpow.pop %v339
  %v341 = vmul.f32 %v287, 1.442695
  %v342 = vpow.pop %v341
  %v343 = vmul.f32 %v288, 1.442695
  %v344 = vpow.pop %v343
  %v345 = vmul.f32 %v289, 1.442695
  %v346 = vpow.pop %v345
  %v347 = vmul.f32 %v290, 1.442695
  %v348 = vpow.pop %v347
  %v349 = vmul.f32 %v291, 1.442695
  %v350 = vpow.pop %v349
  %v351 = vmul.f32 %v292, 1.442695
  %v352 = vpow.pop %v351
  %v353 = vmul.f32 %v293, 1.442695
  %v354 = vpow.pop %v353
  %v355 = vmul.f32 %v294, 1.442695
  %v356 = vpow.pop %v355
  %v357 = vmul.f32 %v295, 1.442695
  %v358 = vpow.pop %v357
  %v359 = vmul.f32 %v296, 1.442695
  %v360 = vpow.pop %v359
  %v361 = vadd.f32 %v298, 1.0
  %v362 = vadd.f32 %v300, 1.0
  %v363 = vadd.f32 %v302, 1.0
  %v364 = vadd.f32 %v304, 1.0
  %v365 = vadd.f32 %v306, 1.0
  %v366 = vadd.f32 %v308, 1.0
  %v367 = vadd.f32 %v310, 1.0
  %v368 = vadd.f32 %v312, 1.0
  %v369 = vadd.f32 %v314, 1.0
  %v370 = vadd.f32 %v316, 1.0
  %v371 = vadd.f32 %v318, 1.0
  %v372 = vadd.f32 %v320, 1.0
  %v373 = vadd.f32 %v322, 1.0
  %v374 = vadd.f32 %v324, 1.0
  %v375 = vadd.f32 %v326, 1.0
  %v376 = vadd.f32 %v328, 1.0
  %v377 = vadd.f32 %v330, 1.0
  %v378 = vadd.f32 %v332, 1.0
  %v379 = vadd.f32 %v334, 1.0
  %v380 = vadd.f32 %v336, 1.0
  %v381 = vadd.f32 %v338, 1.0
  %v382 = vadd.f32 %v340, 1.0
  %v383 = vadd.f32 %v342, 1.0
  %v384 = vadd.f32 %v344, 1.0
  %v385 = vadd.f32 %v346, 1.0
  %v386 = vadd.f32 %v348, 1.0
  %v387 = vadd.f32 %v350, 1.0
  %v388 = vadd.f32 %v352, 1.0
  %v389 = vadd.f32 %v354, 1.0
  %v390 = vadd.f32 %v356, 1.0
  %v391 = vadd.f32 %v358, 1.0
  %v392 = vadd.f32 %v360, 1.0
  %v393 = vlog2.pop %v361
  %v394 = vmul.f32 %v393, 0.6931472
  %v395 = vlog2.pop %v362
  %v396 = vmul.f32 %v395, 0.6931472
  %v397 = vlog2.pop %v363
  %v398 = vmul.f32 %v397, 0.6931472
  %v399 = vlog2.pop %v364
  %v400 = vmul.f32 %v399, 0.6931472
  %v401 = vlog2.pop %v365
  %v402 = vmul.f32 %v401, 0.6931472
  %v403 = vlog2.pop %v366
  %v404 = vmul.f32 %v403, 0.6931472
  %v405 = vlog2.pop %v367
  %v406 = vmul.f32 %v405, 0.6931472
  %v407 = vlog2.pop %v368
  %v408 = vmul.f32 %v407, 0.6931472
  %v409 = vlog2.pop %v369
  %v410 = vmul.f32 %v409, 0.6931472
  %v411 = vlog2.pop %v370
  %v412 = vmul.f32 %v411, 0.6931472
  %v413 = vlog2.pop %v371
  %v414 = vmul.f32 %v413, 0.6931472
  %v415 = vlog2.pop %v372
  %v416 = vmul.f32 %v415, 0.6931472
  %v417 = vlog2.pop %v373
  %v418 = vmul.f32 %v417, 0.6931472
  %v419 = vlog2.pop %v374
  %v420 = vmul.f32 %v419, 0.6931472
  %v421 = vlog2.pop %v375
  %v422 = vmul.f32 %v421, 0.6931472
  %v423 = vlog2.pop %v376
  %v424 = vmul.f32 %v423, 0.6931472
  %v425 = vlog2.pop %v377
  %v426 = vmul.f32 %v425, 0.6931472
  %v427 = vlog2.pop %v378
  %v428 = vmul.f32 %v427, 0.6931472
  %v429 = vlog2.pop %v379
  %v430 = vmul.f32 %v429, 0.6931472
  %v431 = vlog2.pop %v380
  %v432 = vmul.f32 %v431, 0.6931472
  %v433 = vlog2.pop %v381
  %v434 = vmul.f32 %v433, 0.6931472
  %v435 = vlog2.pop %v382
  %v436 = vmul.f32 %v435, 0.6931472
  %v437 = vlog2.pop %v383
  %v438 = vmul.f32 %v437, 0.6931472
  %v439 = vlog2.pop %v384
  %v440 = vmul.f32 %v439, 0.6931472
  %v441 = vlog2.pop %v385
  %v442 = vmul.f32 %v441, 0.6931472
  %v443 = vlog2.pop %v386
  %v444 = vmul.f32 %v443, 0.6931472
  %v445 = vlog2.pop %v387
  %v446 = vmul.f32 %v445, 0.6931472
  %v447 = vlog2.pop %v388
  %v448 = vmul.f32 %v447, 0.6931472
  %v449 = vlog2.pop %v389
  %v450 = vmul.f32 %v449, 0.6931472
  %v451 = vlog2.pop %v390
  %v452 = vmul.f32 %v451, 0.6931472
  %v453 = vlog2.pop %v391
  %v454 = vmul.f32 %v453, 0.6931472
  %v455 = vlog2.pop %v392
  %v456 = vmul.f32 %v455, 0.6931472
  %v457 = vadd.f32 %v201, %v394
  %v458 = vadd.f32 %v202, %v396
  %v459 = vadd.f32 %v203, %v398
  %v460 = vadd.f32 %v204, %v400
  %v461 = vadd.f32 %v205, %v402
  %v462 = vadd.f32 %v206, %v404
  %v463 = vadd.f32 %v207, %v406
  %v464 = vadd.f32 %v208, %v408
  %v465 = vadd.f32 %v209, %v410
  %v466 = vadd.f32 %v210, %v412
  %v467 = vadd.f32 %v211, %v414
  %v468 = vadd.f32 %v212, %v416
  %v469 = vadd.f32 %v213, %v418
  %v470 = vadd.f32 %v214, %v420
  %v471 = vadd.f32 %v215, %v422
  %v472 = vadd.f32 %v216, %v424
  %v473 = vadd.f32 %v217, %v426
  %v474 = vadd.f32 %v218, %v428
  %v475 = vadd.f32 %v219, %v430
  %v476 = vadd.f32 %v220, %v432
  %v477 = vadd.f32 %v221, %v434
  %v478 = vadd.f32 %v222, %v436
  %v479 = vadd.f32 %v223, %v438
  %v480 = vadd.f32 %v224, %v440
  %v481 = vadd.f32 %v225, %v442
  %v482 = vadd.f32 %v226, %v444
  %v483 = vadd.f32 %v227, %v446
  %v484 = vadd.f32 %v228, %v448
  %v485 = vadd.f32 %v229, %v450
  %v486 = vadd.f32 %v230, %v452
  %v487 = vadd.f32 %v231, %v454
  %v488 = vadd.f32 %v232, %v456
  %v489 = vadd.f32 %v457, %v465
  %v490 = vadd.f32 %v458, %v466
  %v491 = vadd.f32 %v459, %v467
  %v492 = vadd.f32 %v460, %v468
  %v493 = vadd.f32 %v461, %v469
  %v494 = vadd.f32 %v462, %v470
  %v495 = vadd.f32 %v463, %v471
  %v496 = vadd.f32 %v464, %v472
  %v497 = vadd.f32 %v489, %v473
  %v498 = vadd.f32 %v490, %v474
  %v499 = vadd.f32 %v491, %v475
  %v500 = vadd.f32 %v492, %v476
  %v501 = vadd.f32 %v493, %v477
  %v502 = vadd.f32 %v494, %v478
  %v503 = vadd.f32 %v495, %v479
  %v504 = vadd.f32 %v496, %v480
  %v505 = vadd.f32 %v497, %v481
  %v506 = vadd.f32 %v498, %v482
  %v507 = vadd.f32 %v499, %v483
  %v508 = vadd.f32 %v500, %v484
  %v509 = vadd.f32 %v501, %v485
  %v510 = vadd.f32 %v502, %v486
  %v511 = vadd.f32 %v503, %v487
  %v512 = vadd.f32 %v504, %v488
  %v513 = vld [vmem:[#allocation2] sm:$0xff]
  %v514 = vld [vmem:[#allocation2 + $0x8] sm:$0xff]
  %v515 = vld [vmem:[#allocation2 + $0x10] sm:$0xff]
  %v516 = vld [vmem:[#allocation2 + $0x18] sm:$0xff]
  %v517 = vld [vmem:[#allocation2 + $0x20] sm:$0xff]
  %v518 = vld [vmem:[#allocation2 + $0x28] sm:$0xff]
  %v519 = vld [vmem:[#allocation2 + $0x30] sm:$0xff]
  %v520 = vld [vmem:[#allocation2 + $0x38] sm:$0xff]
  %v521 = vadd.f32 %v513, %v505
  %v522 = vadd.f32 %v514, %v506
  %v523 = vadd.f32 %v515, %v507
  %v524 = vadd.f32 %v516, %v508
  %v525 = vadd.f32 %v517, %v509
  %v526 = vadd.f32 %v518, %v510
  %v527 = vadd.f32 %v519, %v511
  %v528 = vadd.f32 %v520, %v512
  %529 = vst [vmem:[#allocation2] sm:$0xff] %v521
  %530 = vst [vmem:[#allocation2 + $0x8] sm:$0xff] %v522
  %531 = vst [vmem:[#allocation2 + $0x10] sm:$0xff] %v523
  %532 = vst [vmem:[#allocation2 + $0x18] sm:$0xff] %v524
  %533 = vst [vmem:[#allocation2 + $0x20] sm:$0xff] %v525
  %534 = vst [vmem:[#allocation2 + $0x28] sm:$0xff] %v526
  %535 = vst [vmem:[#allocation2 + $0x30] sm:$0xff] %v527
  %536 = vst [vmem:[#allocation2 + $0x38] sm:$0xff] %v528
  // Predicated region
  $region14: #{bce_loss.1} parent=0 // pred_check
    %p537 = pneg %p61
  $region15: #{bce_loss.1} parent=0 // pred_check_branch
    %539 = sbr.rel (%p537) target = $region17
  $region16: #{bce_loss.1} parent=0 // pred_region
    %v540 = vld [vmem:[#allocation2] sm:$0xff]
    %v541 = vld [vmem:[#allocation2 + $0x8] sm:$0xff]
    %v542 = vld [vmem:[#allocation2 + $0x10] sm:$0xff]
    %v543 = vld [vmem:[#allocation2 + $0x18] sm:$0xff]
    %v544 = vld [vmem:[#allocation2 + $0x20] sm:$0xff]
    %v545 = vld [vmem:[#allocation2 + $0x28] sm:$0xff]
    %v546 = vld [vmem:[#allocation2 + $0x30] sm:$0xff]
    %v547 = vld [vmem:[#allocation2 + $0x38] sm:$0xff]
    %548 = vst [vmem:[%s2] sm:$0xff] %v540
    %549 = vst [vmem:[%s2 + $0x8] sm:$0xff] %v541
    %550 = vst [vmem:[%s2 + $0x10] sm:$0xff] %v542
    %551 = vst [vmem:[%s2 + $0x18] sm:$0xff] %v543
    %552 = vst [vmem:[%s2 + $0x20] sm:$0xff] %v544
    %553 = vst [vmem:[%s2 + $0x28] sm:$0xff] %v545
    %554 = vst [vmem:[%s2 + $0x30] sm:$0xff] %v546
    %555 = vst [vmem:[%s2 + $0x38] sm:$0xff] %v547
  $region17: #{bce_loss.1} parent=0 // pred_fallthru
    _
  // Predicated region
  $region18: #{bce_loss.1} parent=0 // pred_check
    _
  $region19: #{bce_loss.1} parent=0 // pred_check_branch
    %557 = sbr.rel (0) target = $region21
  $region20: #{bce_loss.1} parent=0 // pred_region
    _
  $region21: #{bce_loss.1} parent=0 // pred_fallthru
    _
  // Predicated region
  $region22: #{bce_loss.1} parent=0 // pred_check
    _
  $region23: #{bce_loss.1} parent=0 // pred_check_branch
    %559 = sbr.rel (0) target = $region25
  $region24: #{bce_loss.1} parent=0 // pred_region
    _
  $region25: #{bce_loss.1} parent=0 // pred_fallthru
    _

</llo_original>
